<compile_context>
chip_gen: v7x
topology: tpu7x:2x2x1
jax: 0.10.0
libtpu: 0.0.40
codegen_flags: <defaults>
</compile_context>

<pallas_src>
import functools

import jax
import jax.numpy as jnp
from jax.experimental import pallas as pl
from jax.experimental.pallas import tpu as pltpu


def _round_up(n, m):
    return ((n + m - 1) // m) * m


_VMEM_LIMIT = 32 * 1024 * 1024    # explicit scoped-VMEM limit (safe on v5e/v6e/v7x)
_TILE_BUDGET = 16 * 1024 * 1024   # keep double-buffered blocks well under the limit


# ---------------------------------------------------------------------------
# Kernel A: class-on-sublane layout, blocks (1, C, TN).
# Used for NCHW inputs with small C (lane-dense compute, no transpose in glue).
# ---------------------------------------------------------------------------
def _myloss_kernel_cls(*refs, gamma, hw, tn, has_xd):
    if has_xd:
        x_ref, x2_ref, xd_ref, t_ref, a_ref, out_ref, acc_ref = refs
    else:
        x_ref, x2_ref, t_ref, a_ref, out_ref, acc_ref = refs
        xd_ref = None

    b = pl.program_id(0)
    j = pl.program_id(1)
    nj = pl.num_programs(1)
    step = b * nj + j
    last = pl.num_programs(0) * nj - 1

    @pl.when(step == 0)
    def _():
        acc_ref[...] = jnp.zeros_like(acc_ref)

    x = x_ref[...].astype(jnp.float32)          # (1, C, TN)
    x2 = x2_ref[...].astype(jnp.float32)
    t = t_ref[...]                              # (1, 1, TN) int32

    cls = jax.lax.broadcasted_iota(jnp.int32, x.shape, 1)
    onehot = cls == t                           # (1, C, TN)

    def logsm_gather(z):
        m = jnp.max(z, axis=1, keepdims=True)
        lse = jnp.log(jnp.sum(jnp.exp(z - m), axis=1, keepdims=True)) + m
        return jnp.sum(jnp.where(onehot, z - lse, 0.0), axis=1, keepdims=True)

    logpt = logsm_gather(x)                     # (1, 1, TN)  log p_t
    logpt2 = logsm_gather(x2)                   # log p_t2
    if has_xd:
        logptd = logsm_gather(xd_ref[...].astype(jnp.float32))  # log p_t3
    else:
        logptd = logpt                          # 'dimp': denominator is pt itself

    # alpha[target]: (1, C, 1) broadcast against onehot, summed over classes.
    at = jnp.sum(jnp.where(onehot, a_ref[...].astype(jnp.float32), 0.0),
                 axis=1, keepdims=True)         # (1, 1, TN)

    d = logpt2 - logptd
    if gamma != 1:
        d = d * gamma
    p_pow = jnp.exp(d)                          # (pt2/ptd)**gamma, fused

    loss = -p_pow * (logpt * at)                # (1, 1, TN)

    lane = jax.lax.broadcasted_iota(jnp.int32, loss.shape, 2) + j * tn
    loss = jnp.where(lane < hw, loss, 0.0)      # mask spatial padding in-kernel

    acc_ref[...] += loss

    @pl.when(step == last)
    def _():
        out_ref[...] = jnp.sum(acc_ref[...], axis=2)   # (1, 1)


# ---------------------------------------------------------------------------
# Kernel B: row-tiled layout, blocks (TM, C).
# Used for already-flat (N, C) inputs (or large class counts).
# ---------------------------------------------------------------------------
def _myloss_kernel_rows(*refs, gamma, n_valid, tm, has_xd):
    if has_xd:
        x_ref, x2_ref, xd_ref, t_ref, a_ref, out_ref, acc_ref = refs
    else:
        x_ref, x2_ref, t_ref, a_ref, out_ref, acc_ref = refs
        xd_ref = None

    i = pl.program_id(0)

    @pl.when(i == 0)
    def _():
        acc_ref[...] = jnp.zeros_like(acc_ref)

    x = x_ref[...].astype(jnp.float32)          # (TM, C)
    x2 = x2_ref[...].astype(jnp.float32)
    t = t_ref[...]                              # (TM, 1) int32

    col = jax.lax.broadcasted_iota(jnp.int32, x.shape, 1)
    onehot = col == t                           # (TM, C)

    def logsm_gather(z):
        m = jnp.max(z, axis=1, keepdims=True)
        lse = jnp.log(jnp.sum(jnp.exp(z - m), axis=1, keepdims=True)) + m
        return jnp.sum(jnp.where(onehot, z - lse, 0.0), axis=1, keepdims=True)

    logpt = logsm_gather(x)                     # (TM, 1)
    logpt2 = logsm_gather(x2)
    if has_xd:
        logptd = logsm_gather(xd_ref[...].astype(jnp.float32))
    else:
        logptd = logpt

    at = jnp.sum(jnp.where(onehot, a_ref[...].astype(jnp.float32), 0.0),
                 axis=1, keepdims=True)         # (TM, 1)

    d = logpt2 - logptd
    if gamma != 1:
        d = d * gamma
    p_pow = jnp.exp(d)

    loss = -p_pow * (logpt * at)                # (TM, 1)

    row = jax.lax.broadcasted_iota(jnp.int32, loss.shape, 0) + i * tm
    loss = jnp.where(row < n_valid, loss, 0.0)  # mask padded rows in-kernel

    acc_ref[...] += loss

    @pl.when(i == pl.num_programs(0) - 1)
    def _():
        out_ref[...] = jnp.sum(acc_ref[...], axis=0, keepdims=True)  # (1, 1)


def _alpha_vector(alpha, C):
    if alpha is None:
        return jnp.ones((C,), dtype=jnp.float32)
    if isinstance(alpha, (float, int)):
        avec = [float(alpha), 1.0 - float(alpha)]
    else:
        avec = [float(a) for a in alpha]
    if len(avec) < C:
        # TODO(synk): PyTorch's alpha.gather would raise for targets >= len(alpha);
        # we zero-pad the weight vector instead of erroring.
        avec = avec + [0.0] * (C - len(avec))
    return jnp.asarray(avec[:C], dtype=jnp.float32)


def my_loss(x, target, x2, x3=None, *, gamma=1, alpha=None, size_average=True,
            mode="dimp", tile_rows=512, tile_lanes=2048):
    """JAX/Pallas equivalent of MyLoss.forward.

    x, x2, x3 : (B, C, H, W)/(B, C, L) or (N, C) float arrays (f32 or bf16).
    target    : integer array with B*H*W (or N) elements.
    gamma     : static Python number (baked into the kernel).
    alpha     : None, float, or list of per-class weights.
    """
    if mode == "imp":
        if x3 is None:
            raise ValueError("mode='imp' requires input3")
        has_xd = True
    elif mode == "dimp":
        has_xd = False
    else:
        raise ValueError(f"Unknown mode: {mode}")

    if x.ndim > 2 and x.shape[1] <= 128:
        # ---- lane-dense path: (B, C, HW), class axis on sublanes ------------
        B, C = x.shape[0], x.shape[1]
        xs = [x.reshape(B, C, -1), x2.reshape(B, C, -1)]
        if has_xd:
            xs.append(x3.reshape(B, C, -1))
        HW = xs[0].shape[2]
        t3 = target.reshape(B, 1, HW).astype(jnp.int32)

        n_in = len(xs)
        itemsz = x.dtype.itemsize
        per_lane = n_in * 2 * C * itemsz + 2 * 4 + 4      # dbl-buffered logits + target + acc
        tn_cap = max(128, (_TILE_BUDGET // per_lane) // 128 * 128)
        tn = min(_round_up(min(tile_lanes, HW), 128), tn_cap)
        hwp = _round_up(HW, tn)
        pad = hwp - HW
        if pad:
            xs = [jnp.pad(a, ((0, 0), (0, 0), (0, pad))) for a in xs]
            t3 = jnp.pad(t3, ((0, 0), (0, 0), (0, pad)))
        alpha_arr = _alpha_vector(alpha, C).reshape(1, C, 1)

        kernel = functools.partial(_myloss_kernel_cls, gamma=gamma, hw=HW,
                                   tn=tn, has_xd=has_xd)
        in_specs = [pl.BlockSpec((1, C, tn), lambda b, j: (b, 0, j))
                    for _ in range(n_in)]
        in_specs += [pl.BlockSpec((1, 1, tn), lambda b, j: (b, 0, j)),
                     pl.BlockSpec((1, C, 1), lambda b, j: (0, 0, 0))]
        # TODO(synk): on v7x (2 TensorCores) per-batch partial sums with "parallel"
        # semantics on the batch axis would enable megacore sharding; kept as a
        # single resident accumulator here for portability.
        loss_sum = pl.pallas_call(
            kernel,
            out_shape=jax.ShapeDtypeStruct((1, 1), jnp.float32),
            grid_spec=pltpu.PrefetchScalarGridSpec(
                num_scalar_prefetch=0,
                grid=(B, hwp // tn),
                in_specs=in_specs,
                out_specs=pl.BlockSpec((1, 1), lambda b, j: (0, 0)),
                scratch_shapes=[pltpu.VMEM((1, 1, tn), jnp.float32)],
            ),
            compiler_params=pltpu.CompilerParams(
                dimension_semantics=("arbitrary", "arbitrary"),
                vmem_limit_bytes=_VMEM_LIMIT),
        )(*(xs + [t3, alpha_arr]))[0, 0]
        n_rows = B * HW
    else:
        # ---- row-tiled path: flatten to (N, C) like the PyTorch reshapes ----
        def flatten(a):
            if a.ndim > 2:
                Bb, Cc = a.shape[0], a.shape[1]
                return jnp.transpose(a.reshape(Bb, Cc, -1), (0, 2, 1)).reshape(-1, Cc)
            return a

        xs = [flatten(x), flatten(x2)]
        if has_xd:
            xs.append(flatten(x3))
        N, C = xs[0].shape
        t2 = target.reshape(-1, 1).astype(jnp.int32)

        n_in = len(xs)
        itemsz = x.dtype.itemsize
        per_row = n_in * 2 * C * itemsz + 2 * 4 + 4
        tm_cap = max(8, (_TILE_BUDGET // per_row) // 8 * 8)
        tm = min(_round_up(min(tile_rows, N), 8), tm_cap)
        np_rows = _round_up(N, tm)
        pad = np_rows - N
        if pad:
            xs = [jnp.pad(a, ((0, pad), (0, 0))) for a in xs]
            t2 = jnp.pad(t2, ((0, pad), (0, 0)))
        alpha_arr = _alpha_vector(alpha, C).reshape(1, C)

        kernel = functools.partial(_myloss_kernel_rows, gamma=gamma, n_valid=N,
                                   tm=tm, has_xd=has_xd)
        in_specs = [pl.BlockSpec((tm, C), lambda i: (i, 0))
                    for _ in range(n_in)]
        in_specs += [pl.BlockSpec((tm, 1), lambda i: (i, 0)),
                     pl.BlockSpec((1, C), lambda i: (0, 0))]
        loss_sum = pl.pallas_call(
            kernel,
            out_shape=jax.ShapeDtypeStruct((1, 1), jnp.float32),
            grid_spec=pltpu.PrefetchScalarGridSpec(
                num_scalar_prefetch=0,
                grid=(np_rows // tm,),
                in_specs=in_specs,
                out_specs=pl.BlockSpec((1, 1), lambda i: (0, 0)),
                scratch_shapes=[pltpu.VMEM((tm, 1), jnp.float32)],
            ),
            compiler_params=pltpu.CompilerParams(
                dimension_semantics=("arbitrary",),
                vmem_limit_bytes=_VMEM_LIMIT),
        )(*(xs + [t2, alpha_arr]))[0, 0]
        n_rows = N

    if size_average:
        return loss_sum / n_rows
    return loss_sum


def _reference(x, target, x2, x3=None, *, gamma=1, alpha=None,
               size_average=True, mode="dimp"):
    """Plain-JAX reference mirroring the PyTorch forward."""
    def flatten(a):
        if a.ndim > 2:
            B, C = a.shape[0], a.shape[1]
            return jnp.transpose(a.reshape(B, C, -1), (0, 2, 1)).reshape(-1, C)
        return a

    xf = flatten(x)
    x2f = flatten(x2)
    t = target.reshape(-1)
    logpt = jnp.take_along_axis(jax.nn.log_softmax(xf, axis=1),
                                t[:, None], axis=1)[:, 0]
    pt = jnp.exp(logpt)
    logpt2 = jnp.take_along_axis(jax.nn.log_softmax(x2f, axis=1),
                                 t[:, None], axis=1)[:, 0]
    pt2 = jnp.exp(logpt2)
    if mode == "dimp":
        p = pt2 / pt
    else:
        x3f = flatten(x3)
        pt3 = jnp.exp(jnp.take_along_axis(jax.nn.log_softmax(x3f, axis=1),
                                          t[:, None], axis=1)[:, 0])
        p = pt2 / pt3
    if alpha is not None:
        if isinstance(alpha, (float, int)):
            avec = jnp.asarray([alpha, 1 - alpha], jnp.float32)
        else:
            avec = jnp.asarray(alpha, jnp.float32)
        logpt = logpt * avec[t]
    loss = -(p ** gamma) * logpt
    return loss.mean() if size_average else loss.sum()


if __name__ == "__main__":
    key = jax.random.PRNGKey(0)
    k1, k2, k3, k4 = jax.random.split(key, 4)

    B, C, H, W = 2, 4, 16, 16
    x = jax.random.normal(k1, (B, C, H, W), dtype=jnp.float32)
    x2 = jax.random.normal(k2, (B, C, H, W), dtype=jnp.float32)
    x3 = jax.random.normal(k4, (B, C, H, W), dtype=jnp.float32)
    target = jax.random.randint(k3, (B, H, W), 0, C, dtype=jnp.int32)

    # Case 1: module defaults (gamma=1, alpha=None, size_average=True, mode='dimp')
    out = my_loss(x, target, x2)
    out = jax.block_until_ready(out)
    ref = _reference(x, target, x2)
    assert jnp.allclose(out, ref, rtol=1e-4, atol=1e-6), (out, ref)

    # Case 2: 'imp' mode with a third logit tensor, gamma=2, per-class alpha.
    alpha_list = [0.1, 0.2, 0.3, 0.4]
    out2 = my_loss(x, target, x2, x3, gamma=2, alpha=alpha_list, mode="imp")
    out2 = jax.block_until_ready(out2)
    ref2 = _reference(x, target, x2, x3, gamma=2, alpha=alpha_list, mode="imp")
    assert jnp.allclose(out2, ref2, rtol=1e-4, atol=1e-6), (out2, ref2)

    # Case 3: already-flat (N, C) inputs exercising the row-tiled kernel,
    # with N not a multiple of the tile (padding mask inside the kernel).
    N2, C2 = 100, 10
    xa = jax.random.normal(k1, (N2, C2), dtype=jnp.float32)
    xb = jax.random.normal(k2, (N2, C2), dtype=jnp.float32)
    tg = jax.random.randint(k3, (N2,), 0, C2, dtype=jnp.int32)
    out3 = my_loss(xa, tg, xb)
    out3 = jax.block_until_ready(out3)
    ref3 = _reference(xa, tg, xb)
    assert jnp.allclose(out3, ref3, rtol=1e-4, atol=1e-6), (out3, ref3)

    print("KERNEL_OK")
</pallas_src>

<mosaic_0001>
module attributes {stable_mosaic.version = 11 : i64} {
  func.func @_myloss_kernel_cls(%arg0: i32, %arg1: i32, %arg2: memref<1x4x256xf32, #tpu.memory_space<vmem>>, %arg3: memref<1x4x256xf32, #tpu.memory_space<vmem>>, %arg4: memref<1x1x256xi32, #tpu.memory_space<vmem>>, %arg5: memref<1x4x1xf32, #tpu.memory_space<vmem>>, %arg6: memref<1x1xf32, #tpu.memory_space<vmem>>, %arg7: memref<1x1x256xf32, #tpu.memory_space<vmem>>) attributes {dimension_semantics = [#tpu.dimension_semantics<arbitrary>, #tpu.dimension_semantics<arbitrary>], iteration_bounds = array<i64: 2, 1>, scalar_prefetch = 0 : i64, scratch_operands = 1 : i64, tpu.core_type = #tpu.core_type<tc>, window_params = [{transform_indices = @transform_0, window_bounds = array<i64: 1, 4, 256>}, {transform_indices = @transform_1, window_bounds = array<i64: 1, 4, 256>}, {transform_indices = @transform_2, window_bounds = array<i64: 1, 1, 256>}, {pipeline_mode = #tpu.pipeline_mode<synchronous>, transform_indices = @transform_3, window_bounds = array<i64: 1, 4, 1>}, {pipeline_mode = #tpu.pipeline_mode<synchronous>, transform_indices = @transform_4, window_bounds = array<i64: 1, 1>}]} {
    %c1_i32 = arith.constant 1 : i32
    %0 = arith.muli %arg0, %c1_i32 : i32
    %1 = arith.addi %0, %arg1 : i32
    %c0_i32 = arith.constant 0 : i32
    %2 = arith.cmpi eq, %1, %c0_i32 : i32
    %3 = arith.extui %2 : i1 to i32
    %c0_i32_0 = arith.constant 0 : i32
    %4 = arith.cmpi ne, %3, %c0_i32_0 : i32
    scf.if %4 {
      %cst_32 = arith.constant 0.000000e+00 : f32
      %68 = vector.broadcast %cst_32 : f32 to vector<1x1x256xf32>
      %c0_33 = arith.constant 0 : index
      %c0_34 = arith.constant 0 : index
      %c0_35 = arith.constant 0 : index
      %69 = vector.load %arg7[%c0_33, %c0_34, %c0_35] : memref<1x1x256xf32, #tpu.memory_space<vmem>>, vector<1x1x256xf32>
      tpu.vector_store %arg7[%c0_33, %c0_34, %c0_35], %68 {strides = array<i32>} : memref<1x1x256xf32, #tpu.memory_space<vmem>>, vector<1x1x256xf32>,
    } else {
    }
    %c0 = arith.constant 0 : index
    %c0_1 = arith.constant 0 : index
    %c0_2 = arith.constant 0 : index
    %5 = vector.load %arg2[%c0, %c0_1, %c0_2] : memref<1x4x256xf32, #tpu.memory_space<vmem>>, vector<1x4x256xf32>
    %c0_3 = arith.constant 0 : index
    %c0_4 = arith.constant 0 : index
    %c0_5 = arith.constant 0 : index
    %6 = vector.load %arg3[%c0_3, %c0_4, %c0_5] : memref<1x4x256xf32, #tpu.memory_space<vmem>>, vector<1x4x256xf32>
    %c0_6 = arith.constant 0 : index
    %c0_7 = arith.constant 0 : index
    %c0_8 = arith.constant 0 : index
    %7 = vector.load %arg4[%c0_6, %c0_7, %c0_8] : memref<1x1x256xi32, #tpu.memory_space<vmem>>, vector<1x1x256xi32>
    %8 = tpu.iota {dimensions = array<i32: 1>} : vector<1x4x256xi32>
    %9 = vector.broadcast %7 : vector<1x1x256xi32> to vector<1x4x256xi32>
    %10 = arith.cmpi eq, %8, %9 : vector<1x4x256xi32>
    %cst = arith.constant dense<0xFF800000> : vector<1x256xf32>
    %11 = vector.multi_reduction <maximumf>, %5, %cst [1] : vector<1x4x256xf32> to vector<1x256xf32>
    %12 = vector.shape_cast %11 : vector<1x256xf32> to vector<1x1x256xf32>
    %13 = vector.broadcast %12 : vector<1x1x256xf32> to vector<1x4x256xf32>
    %14 = arith.subf %5, %13 : vector<1x4x256xf32>
    %15 = math.exp %14 : vector<1x4x256xf32>
    %cst_9 = arith.constant dense<0.000000e+00> : vector<1x256xf32>
    %16 = vector.multi_reduction <add>, %15, %cst_9 [1] : vector<1x4x256xf32> to vector<1x256xf32>
    %17 = vector.shape_cast %16 : vector<1x256xf32> to vector<1x1x256xf32>
    %18 = math.log %17 : vector<1x1x256xf32>
    %19 = arith.addf %18, %12 : vector<1x1x256xf32>
    %20 = vector.broadcast %19 : vector<1x1x256xf32> to vector<1x4x256xf32>
    %21 = arith.subf %5, %20 : vector<1x4x256xf32>
    %cst_10 = arith.constant 0.000000e+00 : f32
    %22 = vector.broadcast %cst_10 : f32 to vector<1x4x256xf32>
    %23 = arith.select %10, %21, %22 : vector<1x4x256xi1>, vector<1x4x256xf32>
    %cst_11 = arith.constant dense<0.000000e+00> : vector<1x256xf32>
    %24 = vector.multi_reduction <add>, %23, %cst_11 [1] : vector<1x4x256xf32> to vector<1x256xf32>
    %25 = vector.shape_cast %24 : vector<1x256xf32> to vector<1x1x256xf32>
    %cst_12 = arith.constant dense<0xFF800000> : vector<1x256xf32>
    %26 = vector.multi_reduction <maximumf>, %6, %cst_12 [1] : vector<1x4x256xf32> to vector<1x256xf32>
    %27 = vector.shape_cast %26 : vector<1x256xf32> to vector<1x1x256xf32>
    %28 = vector.broadcast %27 : vector<1x1x256xf32> to vector<1x4x256xf32>
    %29 = arith.subf %6, %28 : vector<1x4x256xf32>
    %30 = math.exp %29 : vector<1x4x256xf32>
    %cst_13 = arith.constant dense<0.000000e+00> : vector<1x256xf32>
    %31 = vector.multi_reduction <add>, %30, %cst_13 [1] : vector<1x4x256xf32> to vector<1x256xf32>
    %32 = vector.shape_cast %31 : vector<1x256xf32> to vector<1x1x256xf32>
    %33 = math.log %32 : vector<1x1x256xf32>
    %34 = arith.addf %33, %27 : vector<1x1x256xf32>
    %35 = vector.broadcast %34 : vector<1x1x256xf32> to vector<1x4x256xf32>
    %36 = arith.subf %6, %35 : vector<1x4x256xf32>
    %cst_14 = arith.constant 0.000000e+00 : f32
    %37 = vector.broadcast %cst_14 : f32 to vector<1x4x256xf32>
    %38 = arith.select %10, %36, %37 : vector<1x4x256xi1>, vector<1x4x256xf32>
    %cst_15 = arith.constant dense<0.000000e+00> : vector<1x256xf32>
    %39 = vector.multi_reduction <add>, %38, %cst_15 [1] : vector<1x4x256xf32> to vector<1x256xf32>
    %40 = vector.shape_cast %39 : vector<1x256xf32> to vector<1x1x256xf32>
    %c0_16 = arith.constant 0 : index
    %c0_17 = arith.constant 0 : index
    %c0_18 = arith.constant 0 : index
    %41 = vector.load %arg5[%c0_16, %c0_17, %c0_18] : memref<1x4x1xf32, #tpu.memory_space<vmem>>, vector<1x4x1xf32>
    %cst_19 = arith.constant 0.000000e+00 : f32
    %42 = vector.shape_cast %41 : vector<1x4x1xf32> to vector<1x4x1xf32>
    %43 = vector.broadcast %42 : vector<1x4x1xf32> to vector<1x4x256xf32>
    %44 = vector.broadcast %cst_19 : f32 to vector<1x4x256xf32>
    %45 = arith.select %10, %43, %44 : vector<1x4x256xi1>, vector<1x4x256xf32>
    %cst_20 = arith.constant dense<0.000000e+00> : vector<1x256xf32>
    %46 = vector.multi_reduction <add>, %45, %cst_20 [1] : vector<1x4x256xf32> to vector<1x256xf32>
    %47 = vector.shape_cast %46 : vector<1x256xf32> to vector<1x1x256xf32>
    %48 = arith.subf %40, %25 : vector<1x1x256xf32>
    %49 = math.exp %48 : vector<1x1x256xf32>
    %cst_21 = arith.constant 0.000000e+00 : f32
    %50 = vector.broadcast %cst_21 : f32 to vector<1x1x256xf32>
    %51 = arith.subf %50, %49 : vector<1x1x256xf32>
    %52 = arith.mulf %25, %47 : vector<1x1x256xf32>
    %53 = arith.mulf %51, %52 : vector<1x1x256xf32>
    %54 = tpu.iota {dimensions = array<i32: 2>} : vector<1x1x256xi32>
    %c256_i32 = arith.constant 256 : i32
    %55 = arith.muli %arg1, %c256_i32 : i32
    %56 = vector.broadcast %55 : i32 to vector<1x1x256xi32>
    %57 = arith.addi %54, %56 : vector<1x1x256xi32>
    %c256_i32_22 = arith.constant 256 : i32
    %58 = vector.broadcast %c256_i32_22 : i32 to vector<1x1x256xi32>
    %59 = arith.cmpi slt, %57, %58 : vector<1x1x256xi32>
    %cst_23 = arith.constant 0.000000e+00 : f32
    %60 = vector.broadcast %cst_23 : f32 to vector<1x1x256xf32>
    %61 = arith.select %59, %53, %60 : vector<1x1x256xi1>, vector<1x1x256xf32>
    %c0_24 = arith.constant 0 : index
    %c0_25 = arith.constant 0 : index
    %c0_26 = arith.constant 0 : index
    %62 = vector.load %arg7[%c0_24, %c0_25, %c0_26] : memref<1x1x256xf32, #tpu.memory_space<vmem>>, vector<1x1x256xf32>
    %63 = arith.addf %62, %61 : vector<1x1x256xf32>
    %c0_27 = arith.constant 0 : index
    %c0_28 = arith.constant 0 : index
    %c0_29 = arith.constant 0 : index
    %64 = vector.load %arg7[%c0_27, %c0_28, %c0_29] : memref<1x1x256xf32, #tpu.memory_space<vmem>>, vector<1x1x256xf32>
    tpu.vector_store %arg7[%c0_27, %c0_28, %c0_29], %63 {strides = array<i32>} : memref<1x1x256xf32, #tpu.memory_space<vmem>>, vector<1x1x256xf32>,
    %c1_i32_30 = arith.constant 1 : i32
    %65 = arith.cmpi eq, %1, %c1_i32_30 : i32
    %66 = arith.extui %65 : i1 to i32
    %c0_i32_31 = arith.constant 0 : i32
    %67 = arith.cmpi ne, %66, %c0_i32_31 : i32
    scf.if %67 {
      %c0_32 = arith.constant 0 : index
      %c0_33 = arith.constant 0 : index
      %c0_34 = arith.constant 0 : index
      %68 = vector.load %arg7[%c0_32, %c0_33, %c0_34] : memref<1x1x256xf32, #tpu.memory_space<vmem>>, vector<1x1x256xf32>
      %cst_35 = arith.constant dense<0.000000e+00> : vector<1x1xf32>
      %69 = vector.multi_reduction <add>, %68, %cst_35 [2] : vector<1x1x256xf32> to vector<1x1xf32>
      %c0_36 = arith.constant 0 : index
      %c0_37 = arith.constant 0 : index
      %70 = vector.load %arg6[%c0_36, %c0_37] : memref<1x1xf32, #tpu.memory_space<vmem>>, vector<1x1xf32>
      tpu.vector_store %arg6[%c0_36, %c0_37], %69 {strides = array<i32>} : memref<1x1xf32, #tpu.memory_space<vmem>>, vector<1x1xf32>,
    } else {
    }
    return
  }
  func.func @transform_0(%arg0: i32, %arg1: i32) -> (i32, i32, i32) {
    %c0_i32 = arith.constant 0 : i32
    %c0_i32_0 = arith.constant 0 : i32
    return %arg0, %c0_i32, %arg1 : i32, i32, i32
  }
  func.func @transform_1(%arg0: i32, %arg1: i32) -> (i32, i32, i32) {
    %c0_i32 = arith.constant 0 : i32
    %c0_i32_0 = arith.constant 0 : i32
    return %arg0, %c0_i32, %arg1 : i32, i32, i32
  }
  func.func @transform_2(%arg0: i32, %arg1: i32) -> (i32, i32, i32) {
    %c0_i32 = arith.constant 0 : i32
    %c0_i32_0 = arith.constant 0 : i32
    return %arg0, %c0_i32, %arg1 : i32, i32, i32
  }
  func.func @transform_3(%arg0: i32, %arg1: i32) -> (i32, i32, i32) {
    %c0_i32 = arith.constant 0 : i32
    %c0_i32_0 = arith.constant 0 : i32
    %c0_i32_1 = arith.constant 0 : i32
    %c0_i32_2 = arith.constant 0 : i32
    return %c0_i32, %c0_i32_0, %c0_i32_1 : i32, i32, i32
  }
  func.func @transform_4(%arg0: i32, %arg1: i32) -> (i32, i32) {
    %c0_i32 = arith.constant 0 : i32
    %c0_i32_0 = arith.constant 0 : i32
    %c0_i32_1 = arith.constant 0 : i32
    return %c0_i32, %c0_i32_0 : i32, i32
  }
}

</mosaic_0001>

<llo_original>
// kernel: tpu_custom_call.1
$region0: #{tpu_custom_call.1}
  #allocation0 [shape = 'u32[]', space=smem, size = 0x4, offset = 0x4, fixed_abs, tag = 'smem constant byte address 0x4 - core index']
  #allocation1 [shape = 'u32[144,128]{1,0:T(1,128)}', space=vmem, size = 0x12000, scoped, tag = 'internal scratch']
  #allocation2 [shape = 'f32[1,1,256]{2,1,0:T(1,128)}', space=vmem, size = 0x400, scoped, tag = 'scratch operand']
  %s0 = inlined_call_operand.hbm [shape: f32[2,4,256], index: 0, kind: input, shape index: {}]
  %s1 = inlined_call_operand.hbm [shape: f32[2,4,256], index: 1, kind: input, shape index: {}]
  %s2 = inlined_call_operand.vmem [shape: s32[2,1,256], index: 2, kind: input, shape index: {}]
  %s3 = inlined_call_operand.vmem [shape: f32[1,4,1], index: 3, kind: input, shape index: {}]
  %s4 = inlined_call_operand.hbm [shape: f32[1,1], index: 4, kind: output, shape index: {}]
  %s5 = sld [smem:[#allocation0]]
  $region65: #{tpu_custom_call.1} parent=0
    _
  %s7 = ssub.s32 1, %s5
  %s8 = scalar_select 0, %s7, %s5
  $region1: #{tpu_custom_call.1} parent=0
    #allocation3 [shape = 'u8[8192]{0}', space=vmem, size = 0x2000, scoped, tag = 'input window, operand 0']
    #allocation4 [shape = 's32[2]{0}', space=sflag, size = 0x8, scoped, tag = 'scoped memory for tpu_custom_call.1']
    #allocation5 [shape = 's32[2]{0}', space=sflag, size = 0x8, scoped, tag = 'scoped memory for tpu_custom_call.1']
    #allocation6 [shape = 'u8[8192]{0}', space=vmem, size = 0x2000, scoped, tag = 'input window, operand 1']
    #allocation7 [shape = 's32[2]{0}', space=sflag, size = 0x8, scoped, tag = 'scoped memory for tpu_custom_call.1']
    #allocation8 [shape = 'u8[512]{0}', space=vmem, size = 0x400, scoped, tag = 'output window, operand 0, single buffered']
    %9 = vsyncpa [#allocation4], 0
    %s10 = scalar_lea.sflag [#allocation4], 1
    %11 = vsyncpa %s10, 0
    %12 = vsyncpa [#allocation7], 0
    %s13 = scalar_lea.sflag [#allocation7], 1
    %14 = vsyncpa %s13, 0
    %15 = vsyncpa [#allocation5], 0
    loop: start=0, step=1, limit=4
    $region2: #{tpu_custom_call.1} parent=1 // loop_pre_header
      _
    $region3: #{tpu_custom_call.1} parent=1 // loop_header
      %s17 = sphi 0, %s21
      %p18 = scmp.ge.s32.totalorder %s17, 4
      %s24 = sphi 0, %s36
      %s25 = sphi 0, %s32
      %s26 = sphi 0, %s24
      %s27 = sphi 0, %s25
      %s28 = sphi 0, %s26
      %s29 = sphi 0, %s27
      %s41 = sphi 0, %s43
      %s44 = sphi 0, %s41
      %s45 = sphi 0, %s44
      %s61 = sphi 0, %s45
      %s69 = sphi 0, %s71
      %s72 = sphi 0, %s69
      %s73 = sphi 0, %s72
      %s89 = sphi 0, %s73
      %s97 = sphi 0, %s99
      %s100 = sphi 0, %s97
      %s101 = sphi 0, %s100
      %s117 = sphi 0, %s101
      %s121 = sphi 0, %s121
      %s123 = sphi 0, %s121
      %s124 = sphi 0, %s123
      %s138 = sphi 0, %s124
      %s142 = sphi 0, %s142
      %s144 = sphi 0, %s142
      %s145 = sphi 0, %s144
      %s159 = sphi 0, %s145
    $region4: #{tpu_custom_call.1} parent=1 // loop_header_branch
      %20 = sbr.rel (%p18) target = $region8
    $region5: #{tpu_custom_call.1} parent=1 // loop_body
      %s22 = ssub.s32 %s17, 1
      %s23 = ssub.s32 %s17, 2
      %s30 = sadd.s32 1, %s25
      %p31 = scmp.ge.s32.totalorder %s30, 1
      %s32 = scalar_select %p31, 0, %s30
      %s33 = sadd.s32 1, %s24
      %s34 = scalar_select %p31, %s33, %s24
      %p35 = scmp.ge.s32.totalorder %s34, 2
      %s36 = scalar_select %p35, 0, %s34
      %s37 = ssub.s32 %s24, %s36
      %s38 = ssub.s32 %s25, %s32
      %s39 = sor.u32 %s37, %s38
      %p40 = scmp.eq.s32.totalorder %s39, 0
      %s42 = sadd.s32 %s41, 1
      %s43 = scalar_select %p40, %s41, %s42
      %p46 = pneg %p40
      %p47 = scmp.eq.s32.totalorder %s17, 1
      %p48 = por %p46, %p47
      %p49 = scmp.ne.s32.totalorder %s41, %s44
      %p50 = scmp.eq.s32.totalorder %s17, 0
      %p51 = por %p49, %p50
      %p52 = scmp.ne.s32.totalorder %s41, %s44
      %p53 = scmp.eq.s32.totalorder %s22, 1
      %p54 = por %p52, %p53
      %p55 = scmp.ne.s32.totalorder %s44, %s45
      %p56 = scmp.eq.s32.totalorder %s22, 0
      %p57 = por %p55, %p56
      %p58 = scmp.ne.s32.totalorder %s44, %s45
      %p59 = scmp.eq.s32.totalorder %s23, 1
      %p60 = por %p58, %p59
      %p62 = scmp.ne.s32.totalorder %s45, %s61
      %p63 = scmp.eq.s32.totalorder %s23, 0
      %p64 = por %p62, %p63
      %s65 = ssub.s32 %s24, %s36
      %s66 = ssub.s32 %s25, %s32
      %s67 = sor.u32 %s65, %s66
      %p68 = scmp.eq.s32.totalorder %s67, 0
      %s70 = sadd.s32 %s69, 1
      %s71 = scalar_select %p68, %s69, %s70
      %p74 = pneg %p68
      %p75 = scmp.eq.s32.totalorder %s17, 1
      %p76 = por %p74, %p75
      %p77 = scmp.ne.s32.totalorder %s69, %s72
      %p78 = scmp.eq.s32.totalorder %s17, 0
      %p79 = por %p77, %p78
      %p80 = scmp.ne.s32.totalorder %s69, %s72
      %p81 = scmp.eq.s32.totalorder %s22, 1
      %p82 = por %p80, %p81
      %p83 = scmp.ne.s32.totalorder %s72, %s73
      %p84 = scmp.eq.s32.totalorder %s22, 0
      %p85 = por %p83, %p84
      %p86 = scmp.ne.s32.totalorder %s72, %s73
      %p87 = scmp.eq.s32.totalorder %s23, 1
      %p88 = por %p86, %p87
      %p90 = scmp.ne.s32.totalorder %s73, %s89
      %p91 = scmp.eq.s32.totalorder %s23, 0
      %p92 = por %p90, %p91
      %s93 = ssub.s32 %s24, %s36
      %s94 = ssub.s32 %s25, %s32
      %s95 = sor.u32 %s93, %s94
      %p96 = scmp.eq.s32.totalorder %s95, 0
      %s98 = sadd.s32 %s97, 1
      %s99 = scalar_select %p96, %s97, %s98
      %p102 = pneg %p96
      %p103 = scmp.eq.s32.totalorder %s17, 1
      %p104 = por %p102, %p103
      %p105 = scmp.ne.s32.totalorder %s97, %s100
      %p106 = scmp.eq.s32.totalorder %s17, 0
      %p107 = por %p105, %p106
      %p108 = scmp.ne.s32.totalorder %s97, %s100
      %p109 = scmp.eq.s32.totalorder %s22, 1
      %p110 = por %p108, %p109
      %p111 = scmp.ne.s32.totalorder %s100, %s101
      %p112 = scmp.eq.s32.totalorder %s22, 0
      %p113 = por %p111, %p112
      %p114 = scmp.ne.s32.totalorder %s100, %s101
      %p115 = scmp.eq.s32.totalorder %s23, 1
      %p116 = por %p114, %p115
      %p118 = scmp.ne.s32.totalorder %s101, %s117
      %p119 = scmp.eq.s32.totalorder %s23, 0
      %p120 = por %p118, %p119
      %s122 = sadd.s32 %s121, 1
      %p125 = scmp.eq.s32.totalorder %s17, 1
      %p126 = scmp.ne.s32.totalorder %s121, %s123
      %p127 = scmp.eq.s32.totalorder %s17, 0
      %p128 = por %p126, %p127
      %p129 = scmp.ne.s32.totalorder %s121, %s123
      %p130 = scmp.eq.s32.totalorder %s22, 1
      %p131 = por %p129, %p130
      %p132 = scmp.ne.s32.totalorder %s123, %s124
      %p133 = scmp.eq.s32.totalorder %s22, 0
      %p134 = por %p132, %p133
      %p135 = scmp.ne.s32.totalorder %s123, %s124
      %p136 = scmp.eq.s32.totalorder %s23, 1
      %p137 = por %p135, %p136
      %p139 = scmp.ne.s32.totalorder %s124, %s138
      %p140 = scmp.eq.s32.totalorder %s23, 0
      %p141 = por %p139, %p140
      %s143 = sadd.s32 %s142, 1
      %p146 = scmp.eq.s32.totalorder %s17, 1
      %p147 = scmp.ne.s32.totalorder %s142, %s144
      %p148 = scmp.eq.s32.totalorder %s17, 0
      %p149 = por %p147, %p148
      %p150 = scmp.ne.s32.totalorder %s142, %s144
      %p151 = scmp.eq.s32.totalorder %s22, 1
      %p152 = por %p150, %p151
      %p153 = scmp.ne.s32.totalorder %s144, %s145
      %p154 = scmp.eq.s32.totalorder %s22, 0
      %p155 = por %p153, %p154
      %p156 = scmp.ne.s32.totalorder %s144, %s145
      %p157 = scmp.eq.s32.totalorder %s23, 1
      %p158 = por %p156, %p157
      %p160 = scmp.ne.s32.totalorder %s145, %s159
      %p161 = scmp.eq.s32.totalorder %s23, 0
      %p162 = por %p160, %p161
      %p163 = scmp.le.s32.totalorder 1, %s17
      %p164 = scmp.lt.s32.totalorder %s17, 3
      %p165 = pnand %p163, %p164
      %p166 = pneg %p165
      // Predicated region
      $region9: #{tpu_custom_call.1} parent=5 // pred_check
        _
      $region10: #{tpu_custom_call.1} parent=5 // pred_check_branch
        %168 = sbr.rel (%p165) target = $region12
      $region11: #{tpu_custom_call.1} parent=5 // pred_region
        %s169 = ssub.s32 %s17, 1
        // Predicated region
        $region13: #{tpu_custom_call.1} parent=11 // pred_check
          %p170 = pneg %p134
        $region14: #{tpu_custom_call.1} parent=11 // pred_check_branch
          %172 = sbr.rel (%p170) target = $region16
        $region15: #{tpu_custom_call.1} parent=11 // pred_region
          _
        $region16: #{tpu_custom_call.1} parent=11 // pred_fallthru
          _
      $region12: #{tpu_custom_call.1} parent=5 // pred_fallthru
        _
      %p173 = scmp.lt.s32.totalorder %s17, 2
      // Predicated region
      $region17: #{tpu_custom_call.1} parent=5 // pred_check
        %p174 = pneg %p173
      $region18: #{tpu_custom_call.1} parent=5 // pred_check_branch
        %176 = sbr.rel (%p174) target = $region20
      $region19: #{tpu_custom_call.1} parent=5 // pred_region
        // Predicated region
        $region21: #{tpu_custom_call.1} parent=19 // pred_check
          %p177 = pneg %p51
        $region22: #{tpu_custom_call.1} parent=19 // pred_check_branch
          %179 = sbr.rel (%p177) target = $region24
        $region23: #{tpu_custom_call.1} parent=19 // pred_region
          %s180 = sand.u32 %s41, 1
          %s181 = scalar_lea.sflag [#allocation4], %s180
          %s182 = sand.u32 %s41, 1
          %s183 = smul.addr %s182, 8
          %s184 = scalar_lea.vmem [#allocation3], %s183
          %s185 = smul.u32 2, %s25
          %s187 = ssub.s32 128, 128
          %188 = vsyncadd %s181, %s187
          %s189 = smul.addr %s24, 2
          %s190 = sadd.s32 %s185, %s189
          %s191 = smul.addr %s190, 64
          %s192 = scalar_lea.hbm %s0, %s191
          %s194 = sshll.u32 %s184, 4
          %s195 = int_to_ptr.vmem [resolvable:$true] %s194
          %197 = dma.hbm_to_vmem [thread:$0]  %s192, 128, %s195, %s181
        $region24: #{tpu_custom_call.1} parent=19 // pred_fallthru
          _
        // Predicated region
        $region25: #{tpu_custom_call.1} parent=19 // pred_check
          %p198 = pneg %p79
        $region26: #{tpu_custom_call.1} parent=19 // pred_check_branch
          %200 = sbr.rel (%p198) target = $region28
        $region27: #{tpu_custom_call.1} parent=19 // pred_region
          %s201 = sand.u32 %s69, 1
          %s202 = scalar_lea.sflag [#allocation7], %s201
          %s203 = sand.u32 %s69, 1
          %s204 = smul.addr %s203, 8
          %s205 = scalar_lea.vmem [#allocation6], %s204
          %s206 = smul.u32 2, %s25
          %s208 = ssub.s32 128, 128
          %209 = vsyncadd %s202, %s208
          %s210 = smul.addr %s24, 2
          %s211 = sadd.s32 %s206, %s210
          %s212 = smul.addr %s211, 64
          %s213 = scalar_lea.hbm %s1, %s212
          %s215 = sshll.u32 %s205, 4
          %s216 = int_to_ptr.vmem [resolvable:$true] %s215
          %218 = dma.hbm_to_vmem [thread:$0]  %s213, 128, %s216, %s202
        $region28: #{tpu_custom_call.1} parent=19 // pred_fallthru
          _
        // Predicated region
        $region29: #{tpu_custom_call.1} parent=19 // pred_check
          %p219 = pneg %p107
        $region30: #{tpu_custom_call.1} parent=19 // pred_check_branch
          %221 = sbr.rel (%p219) target = $region32
        $region31: #{tpu_custom_call.1} parent=19 // pred_region
          %s222 = smul.u32 2, %s25
          %p223 = scmp.lt.s32.totalorder %s24, 1
          %s224 = scalar_select %p223, %s24, 1
          %p225 = scmp.lt.s32.totalorder %s222, 1
          %s226 = scalar_select %p225, %s222, 1
          %s227 = smul.addr %s224, 2
          %s228 = sadd.s32 %s226, %s227
          %s229 = scalar_lea.vmem %s2, %s228
          %s230 = smul.u32 2, %s25
        $region32: #{tpu_custom_call.1} parent=19 // pred_fallthru
          _
      $region20: #{tpu_custom_call.1} parent=5 // pred_fallthru
        _
      %p231 = scmp.le.s32.totalorder 1, %s17
      %p232 = scmp.lt.s32.totalorder %s17, 3
      %p233 = pnand %p231, %p232
      %p234 = pneg %p233
      // Predicated region
      $region33: #{tpu_custom_call.1} parent=5 // pred_check
        _
      $region34: #{tpu_custom_call.1} parent=5 // pred_check_branch
        %236 = sbr.rel (%p233) target = $region36
      $region35: #{tpu_custom_call.1} parent=5 // pred_region
        %s237 = ssub.s32 %s17, 1
        %s238 = sand.u32 %s44, 1
        %s239 = scalar_lea.sflag [#allocation4], %s238
        %s240 = sand.u32 %s44, 1
        %s241 = smul.addr %s240, 8
        %s242 = scalar_lea.vmem [#allocation3], %s241
        // Predicated region
        $region37: #{tpu_custom_call.1} parent=35 // pred_check
          %p243 = pneg %p57
        $region38: #{tpu_custom_call.1} parent=35 // pred_check_branch
          %245 = sbr.rel (%p243) target = $region40
        $region39: #{tpu_custom_call.1} parent=35 // pred_region
          %246 = dma.done %s239, 128
        $region40: #{tpu_custom_call.1} parent=35 // pred_fallthru
          _
        %s247 = sand.u32 %s72, 1
        %s248 = scalar_lea.sflag [#allocation7], %s247
        %s249 = sand.u32 %s72, 1
        %s250 = smul.addr %s249, 8
        %s251 = scalar_lea.vmem [#allocation6], %s250
        // Predicated region
        $region41: #{tpu_custom_call.1} parent=35 // pred_check
          %p252 = pneg %p85
        $region42: #{tpu_custom_call.1} parent=35 // pred_check_branch
          %254 = sbr.rel (%p252) target = $region44
        $region43: #{tpu_custom_call.1} parent=35 // pred_region
          %255 = dma.done %s248, 128
        $region44: #{tpu_custom_call.1} parent=35 // pred_fallthru
          _
        %s256 = sand.u32 %s44, 1
        %s257 = scalar_lea.sflag [#allocation4], %s256
        %s258 = sand.u32 %s44, 1
        %s259 = smul.addr %s258, 8
        %s260 = scalar_lea.vmem [#allocation3], %s259
        %p261 = pneg %p57
        %p262 = pneg %p54
        %s263 = sand.u32 %s72, 1
        %s264 = scalar_lea.sflag [#allocation7], %s263
        %s265 = sand.u32 %s72, 1
        %s266 = smul.addr %s265, 8
        %s267 = scalar_lea.vmem [#allocation6], %s266
        %p268 = pneg %p85
        %p269 = pneg %p82
        %s270 = smul.u32 2, %s27
        %p271 = scmp.lt.s32.totalorder %s26, 1
        %s272 = scalar_select %p271, %s26, 1
        %p273 = scmp.lt.s32.totalorder %s270, 1
        %s274 = scalar_select %p273, %s270, 1
        %s275 = smul.addr %s272, 2
        %s276 = sadd.s32 %s274, %s275
        %s277 = scalar_lea.vmem %s2, %s276
        %p278 = pneg %p113
        %p279 = pneg %p110
        %p280 = pneg %p134
        %p281 = pneg %p131
        %p282 = pneg %p155
        %p283 = pneg %p152
        %s284 = smul.u32 2, %s27
        %s285 = smul.u32 2, %s27
        %s286 = smul.u32 2, %s27
        %p287 = scmp.lt.s32.totalorder %s26, 1
        %s288 = scalar_select %p287, %s26, 1
        %p289 = scmp.lt.s32.totalorder %s286, 1
        %s290 = scalar_select %p289, %s286, 1
        %s291 = smul.addr %s288, 2
        %s292 = sadd.s32 %s290, %s291
        %s293 = scalar_lea.vmem %s2, %s292
        %s294 = smul.u32 2, %s27
        %s295 = sadd.s32 %s26, %s27
        %p296 = scmp.eq.s32.totalorder %s295, 0
        // Predicated region
        $region45: #{tpu_custom_call.1} parent=35 // pred_check
          %p297 = pneg %p296
        $region46: #{tpu_custom_call.1} parent=35 // pred_check_branch
          %299 = sbr.rel (%p297) target = $region48
        $region47: #{tpu_custom_call.1} parent=35 // pred_region
          %v300 = vlaneseq
          %vm301 = vcmp.ge.s32.totalorder %v300, 0
          %vm302 = vcmp.lt.s32.totalorder %v300, 256
          %vm303 = vmand %vm301, %vm302
          %304 = vst.msk [vmem:[#allocation2] sm:$0x3] %vm303, 0.0
        $region48: #{tpu_custom_call.1} parent=35 // pred_fallthru
          _
        %v305 = vld [vmem:[%s242] sm:$0xff]
        %v306 = vld [vmem:[%s251] sm:$0xff]
        %v307 = vld [vmem:[%s293] sm:$0x3]
        %v308 = vlaneseq
        %v309 = vshrl.u32 %v308, 7
        %v310 = vlaneseq
        %v311 = vshrl.u32 %v310, 7
        %v312 = vsub.s32 0, %v311
        %v313 = vrot.slane %v307, %v312
        %v314 = vlaneseq
        %v315 = vshrl.u32 %v314, 7
        %v316 = vsub.s32 1, %v315
        %v317 = vrot.slane %v307, %v316
        %vm318 = vcmp.eq.s32.totalorder %v309, %v313
        %vm319 = vcmp.eq.s32.totalorder %v309, %v317
        %v321 = vcombine.high %v305, %v305
        %vm323 = vcmask 1043456
        %v324 = vsel %vm323, %v305, -inf
        %v325 = vrot.slane %v324, 4
        %v326 = vmax.f32 %v324, %v325
        %v327 = vrot.slane %v326, 2
        %v328 = vmax.f32 %v326, %v327
        %v329 = vrot.slane %v328, 1
        %v330 = vmax.f32 %v328, %v329
        %v331 = vsel %vm323, %v321, -inf
        %v332 = vrot.slane %v331, 4
        %v333 = vmax.f32 %v331, %v332
        %v334 = vrot.slane %v333, 2
        %v335 = vmax.f32 %v333, %v334
        %v336 = vrot.slane %v335, 1
        %v337 = vmax.f32 %v335, %v336
        %v340 = vcombine.low %v330, %v337
        %v342 = vsub.f32 %v305, %v340
        %v343 = vmul.f32 %v342, 1.442695
        %v344 = vpow.pop %v343
        %v346 = vcombine.high %v344, %v344
        %v348 = vsel %vm323, %v344, 0.0
        %v349 = vrot.slane %v348, 4
        %v350 = vadd.f32 %v348, %v349
        %v351 = vrot.slane %v350, 2
        %v352 = vadd.f32 %v350, %v351
        %v353 = vrot.slane %v352, 1
        %v354 = vadd.f32 %v352, %v353
        %v355 = vsel %vm323, %v346, 0.0
        %v356 = vrot.slane %v355, 4
        %v357 = vadd.f32 %v355, %v356
        %v358 = vrot.slane %v357, 2
        %v359 = vadd.f32 %v357, %v358
        %v360 = vrot.slane %v359, 1
        %v361 = vadd.f32 %v359, %v360
        %v362 = vlog2.pop %v354
        %v363 = vmul.f32 %v362, 0.6931472
        %v364 = vlog2.pop %v361
        %v365 = vmul.f32 %v364, 0.6931472
        %v366 = vadd.f32 %v363, %v330
        %v367 = vadd.f32 %v365, %v337
        %v370 = vcombine.low %v366, %v367
        %v372 = vsub.f32 %v305, %v370
        %v374 = vcombine.high %v372, %v372
        %v376 = vsel %vm318, %v372, 0.0
        %v377 = vsel %vm319, %v374, 0.0
        %v378 = vsel %vm323, %v376, 0.0
        %v379 = vrot.slane %v378, 4
        %v380 = vadd.f32 %v378, %v379
        %v381 = vrot.slane %v380, 2
        %v382 = vadd.f32 %v380, %v381
        %v383 = vrot.slane %v382, 1
        %v384 = vadd.f32 %v382, %v383
        %v385 = vsel %vm323, %v377, 0.0
        %v386 = vrot.slane %v385, 4
        %v387 = vadd.f32 %v385, %v386
        %v388 = vrot.slane %v387, 2
        %v389 = vadd.f32 %v387, %v388
        %v390 = vrot.slane %v389, 1
        %v391 = vadd.f32 %v389, %v390
        %v393 = vcombine.high %v306, %v306
        %v395 = vsel %vm323, %v306, -inf
        %v396 = vrot.slane %v395, 4
        %v397 = vmax.f32 %v395, %v396
        %v398 = vrot.slane %v397, 2
        %v399 = vmax.f32 %v397, %v398
        %v400 = vrot.slane %v399, 1
        %v401 = vmax.f32 %v399, %v400
        %v402 = vsel %vm323, %v393, -inf
        %v403 = vrot.slane %v402, 4
        %v404 = vmax.f32 %v402, %v403
        %v405 = vrot.slane %v404, 2
        %v406 = vmax.f32 %v404, %v405
        %v407 = vrot.slane %v406, 1
        %v408 = vmax.f32 %v406, %v407
        %v411 = vcombine.low %v401, %v408
        %v413 = vsub.f32 %v306, %v411
        %v414 = vmul.f32 %v413, 1.442695
        %v415 = vpow.pop %v414
        %v417 = vcombine.high %v415, %v415
        %v419 = vsel %vm323, %v415, 0.0
        %v420 = vrot.slane %v419, 4
        %v421 = vadd.f32 %v419, %v420
        %v422 = vrot.slane %v421, 2
        %v423 = vadd.f32 %v421, %v422
        %v424 = vrot.slane %v423, 1
        %v425 = vadd.f32 %v423, %v424
        %v426 = vsel %vm323, %v417, 0.0
        %v427 = vrot.slane %v426, 4
        %v428 = vadd.f32 %v426, %v427
        %v429 = vrot.slane %v428, 2
        %v430 = vadd.f32 %v428, %v429
        %v431 = vrot.slane %v430, 1
        %v432 = vadd.f32 %v430, %v431
        %v433 = vlog2.pop %v425
        %v434 = vmul.f32 %v433, 0.6931472
        %v435 = vlog2.pop %v432
        %v436 = vmul.f32 %v435, 0.6931472
        %v437 = vadd.f32 %v434, %v401
        %v438 = vadd.f32 %v436, %v408
        %v441 = vcombine.low %v437, %v438
        %v443 = vsub.f32 %v306, %v441
        %v445 = vcombine.high %v443, %v443
        %v447 = vsel %vm318, %v443, 0.0
        %v448 = vsel %vm319, %v445, 0.0
        %v449 = vsel %vm323, %v447, 0.0
        %v450 = vrot.slane %v449, 4
        %v451 = vadd.f32 %v449, %v450
        %v452 = vrot.slane %v451, 2
        %v453 = vadd.f32 %v451, %v452
        %v454 = vrot.slane %v453, 1
        %v455 = vadd.f32 %v453, %v454
        %v456 = vsel %vm323, %v448, 0.0
        %v457 = vrot.slane %v456, 4
        %v458 = vadd.f32 %v456, %v457
        %v459 = vrot.slane %v458, 2
        %v460 = vadd.f32 %v458, %v459
        %v461 = vrot.slane %v460, 1
        %v462 = vadd.f32 %v460, %v461
        %v463 = vld [vmem:[%s3] sm:$0xf]
        %465 = vset.pattern.permute.xlu0 0
        %466 = vperm.xlu0 %465, %v463
        %v467 = vpop.permute.xlu0 %466
        %v469 = vsel %vm318, %v467, 0.0
        %v470 = vsel %vm319, %v467, 0.0
        %v471 = vsel %vm323, %v469, 0.0
        %v472 = vrot.slane %v471, 4
        %v473 = vadd.f32 %v471, %v472
        %v474 = vrot.slane %v473, 2
        %v475 = vadd.f32 %v473, %v474
        %v476 = vrot.slane %v475, 1
        %v477 = vadd.f32 %v475, %v476
        %v478 = vsel %vm323, %v470, 0.0
        %v479 = vrot.slane %v478, 4
        %v480 = vadd.f32 %v478, %v479
        %v481 = vrot.slane %v480, 2
        %v482 = vadd.f32 %v480, %v481
        %v483 = vrot.slane %v482, 1
        %v484 = vadd.f32 %v482, %v483
        %v485 = vsub.f32 %v455, %v384
        %v486 = vsub.f32 %v462, %v391
        %v487 = vmul.f32 %v485, 1.442695
        %v488 = vpow.pop %v487
        %v489 = vmul.f32 %v486, 1.442695
        %v490 = vpow.pop %v489
        %v491 = vsub.f32 0.0, %v488
        %v492 = vsub.f32 0.0, %v490
        %v493 = vmul.f32 %v384, %v477
        %v494 = vmul.f32 %v391, %v484
        %v495 = vmul.f32 %v491, %v493
        %v496 = vmul.f32 %v492, %v494
        %v497 = vlaneseq
        %v498 = vand.u32 %v497, 127
        %v499 = vadd.s32 %v498, 128
        %s500 = smul.u32 %s27, 256
        %v501 = vstv %s500
        %v502 = vadd.s32 %v498, %v501
        %v503 = vadd.s32 %v499, %v501
        %vm504 = vcmp.lt.s32.totalorder %v502, 256
        %vm505 = vcmp.lt.s32.totalorder %v503, 256
        %v506 = vsel %vm504, %v495, 0.0
        %v507 = vsel %vm505, %v496, 0.0
        %v508 = vld [vmem:[#allocation2] sm:$0x3]
        %v511 = vcombine.low %v506, %v507
        %v513 = vunpack.c.l.s4 1966171168
        %v514 = vunpack.c.0.s8 %v513
        %v515 = vlaneseq
        %v516 = vshrl.u32 %v515, 7
        %v517 = vsub.s32 %v514, %v516
        %v518 = vrot.slane %v511, %v517
        %v520 = vunpack.c.l.s4 1966171168
        %v521 = vunpack.c.0.s8 %v520
        %v522 = vlaneseq
        %v523 = vshrl.u32 %v522, 7
        %v524 = vsub.s32 %v521, %v523
        %v525 = vrot.slane %v518, %v524
        %v527 = vadd.f32 %v508, %v525
        %v528 = vlaneseq
        %vm529 = vcmp.ge.s32.totalorder %v528, 0
        %vm530 = vcmp.lt.s32.totalorder %v528, 256
        %vm531 = vmand %vm529, %vm530
        %532 = vst.msk [vmem:[#allocation2] sm:$0x3] %vm531, %v527
        %p533 = scmp.eq.s32.totalorder %s295, 1
        // Predicated region
        $region49: #{tpu_custom_call.1} parent=35 // pred_check
          %p534 = pneg %p533
        $region50: #{tpu_custom_call.1} parent=35 // pred_check_branch
          %536 = sbr.rel (%p534) target = $region52
        $region51: #{tpu_custom_call.1} parent=35 // pred_region
          %v537 = vld [vmem:[#allocation2] sm:$0x3]
          %v539 = vlaneseq
          %v540 = vshrl.u32 %v539, 7
          %v541 = vsub.s32 0, %v540
          %v542 = vrot.slane %v537, %v541
          %v543 = vlaneseq
          %v544 = vshrl.u32 %v543, 7
          %v545 = vsub.s32 1, %v544
          %v546 = vrot.slane %v537, %v545
          %vm549 = vcmask 1040384
          %v550 = vsel %vm549, %v542, 0.0
          %v551 = vsel %vm549, %v546, 0.0
          %v552 = vadd.f32 %v550, %v551
          %553 = vadd.xlane.f32.xlu0 %v552
          %v554 = vpop.xlane.xlu0 %553
          %vm555 = vcmask 0
          %556 = vst.msk [vmem:[#allocation8] sm:$0x1] %vm555, %v554
        $region52: #{tpu_custom_call.1} parent=35 // pred_fallthru
          _
        // Predicated region
        $region53: #{tpu_custom_call.1} parent=35 // pred_check
          %p557 = pneg %p152
        $region54: #{tpu_custom_call.1} parent=35 // pred_check_branch
          %559 = sbr.rel (%p557) target = $region56
        $region55: #{tpu_custom_call.1} parent=35 // pred_region
          %s561 = ssub.s32 16, 16
          %562 = vsyncadd [#allocation5], %s561
          %s564 = sshll.u32 [#allocation8], 4
          %s565 = int_to_ptr.vmem [resolvable:$true] %s564
          %567 = dma.vmem_to_hbm [thread:$0]  %s565, 16, %s4, [#allocation5]
        $region56: #{tpu_custom_call.1} parent=35 // pred_fallthru
          _
        // Predicated region
        $region57: #{tpu_custom_call.1} parent=35 // pred_check
          %p568 = pneg %p152
        $region58: #{tpu_custom_call.1} parent=35 // pred_check_branch
          %570 = sbr.rel (%p568) target = $region60
        $region59: #{tpu_custom_call.1} parent=35 // pred_region
          %571 = dma.done [#allocation5], 16
        $region60: #{tpu_custom_call.1} parent=35 // pred_fallthru
          _
      $region36: #{tpu_custom_call.1} parent=5 // pred_fallthru
        _
      %p572 = scmp.le.s32.totalorder 2, %s17
      // Predicated region
      $region61: #{tpu_custom_call.1} parent=5 // pred_check
        %p573 = pneg %p572
      $region62: #{tpu_custom_call.1} parent=5 // pred_check_branch
        %575 = sbr.rel (%p573) target = $region64
      $region63: #{tpu_custom_call.1} parent=5 // pred_region
        %s576 = ssub.s32 %s17, 2
      $region64: #{tpu_custom_call.1} parent=5 // pred_fallthru
        _
    $region6: #{tpu_custom_call.1} parent=1 // loop_footer
      %s21 = sadd.s32 1, %s17
    $region7: #{tpu_custom_call.1} parent=1 // loop_footer_branch
      %16 = sbr.rel target = $region3
    $region8: #{tpu_custom_call.1} parent=1 // loop_exit
      _
    %577 = vsyncpa [#allocation4], 1
    %s578 = scalar_lea.sflag [#allocation4], 1
    %579 = vsyncpa %s578, 1
    %580 = vsyncpa [#allocation7], 1
    %s581 = scalar_lea.sflag [#allocation7], 1
    %582 = vsyncpa %s581, 1
    %583 = vsyncpa [#allocation5], 1
    %s584 = scalar_lea.sflag [#allocation5], 1
    %585 = vsyncpa %s584, 1

</llo_original>
